<compile_context>
chip_gen: v7x
topology: tpu7x:2x2x1
jax: 0.10.0
libtpu: 0.0.40
codegen_flags: <defaults>
</compile_context>

<pallas_src>
import math

import jax
import jax.numpy as jnp
from jax.experimental import pallas as pl
from jax.experimental.pallas import tpu as pltpu


# ---------------------------------------------------------------------------
# torch.squeeze(dim=...) shape semantics (applied purely on static shapes)
# ---------------------------------------------------------------------------
def _torch_squeeze_shape(shape, dim):
    """Mimic torch.Tensor.squeeze(dim=dim) shape semantics exactly."""
    ndim = len(shape)
    d = dim if dim >= 0 else dim + ndim
    if d < 0 or d >= ndim:
        raise IndexError(f"dim {dim} out of range for shape {shape}")
    if shape[d] != 1:
        return tuple(shape)          # squeeze of a non-1 dim is a no-op
    return tuple(s for i, s in enumerate(shape) if i != d)


def squeeze_output_shape(in_shape, dims, n_squeezes):
    """Apply the Squeeze.forward loop purely on shapes."""
    shape = tuple(in_shape)
    for dim, times in zip(dims, n_squeezes):
        for _ in range(times):
            shape = _torch_squeeze_shape(shape, dim)
    return shape


# ---------------------------------------------------------------------------
# Pallas identity-copy kernel over a lane-dense, row-tiled 2D slab
# ---------------------------------------------------------------------------
def _copy_kernel(x_ref, o_ref):
    # One VMEM load + one VMEM store per tile; the BlockSpec pipeline
    # double-buffers the HBM<->VMEM DMAs across grid steps.
    o_ref[...] = x_ref[...]


# Lane widths to try (largest first); all multiples of 128 so stores are
# full-width `vst`, never masked `vst.msk`.
_LANE_CANDIDATES = (2048, 1024, 512, 256, 128)

# ~2 MiB per tile => 2 in-bufs + 2 out-bufs ~= 8 MiB of scoped VMEM.
# Safe on v5e (16 MiB scoped default), v6e (32 MiB) and v7x (32 MiB scoped,
# 64 MiB physical) without touching vmem_limit_bytes.
_TARGET_TILE_BYTES = 2 * 1024 * 1024


def _pick_slab_shape(total, fallback_last):
    """Choose a lane-dense (rows, cols) factorization of `total` elements."""
    for lanes in _LANE_CANDIDATES:
        if total % lanes == 0:
            return total // lanes, lanes
    # total is not a multiple of 128: fall back to the natural (rows, last)
    # slab (correct, just not lane-dense).
    last = max(fallback_last, 1)
    return max(total // last, 1), last


def _pick_tile_rows(rows, cols, itemsize):
    """Row-tile size: ~_TARGET_TILE_BYTES per buffer, sublane aligned."""
    row_bytes = max(cols * itemsize, 1)
    tr = max(_TARGET_TILE_BYTES // row_bytes, 8)
    tr -= tr % 8                      # (8, 128) sublane rule when tr < rows
    if tr >= 32:
        tr -= tr % 32                 # keeps bf16/int8 sublane packing unmasked
    return min(max(tr, 1), rows)


def pallas_identity_copy_2d(x2d):
    rows, cols = x2d.shape
    tr = _pick_tile_rows(rows, cols, x2d.dtype.itemsize)
    grid = (pl.cdiv(rows, tr),)
    return pl.pallas_call(
        _copy_kernel,
        out_shape=jax.ShapeDtypeStruct((rows, cols), x2d.dtype),
        grid_spec=pltpu.PrefetchScalarGridSpec(
            num_scalar_prefetch=0,
            grid=grid,
            # Row-tiled, full lane width. When tr == rows the block equals the
            # full array dims, so the (8,128) divisibility rule is satisfied
            # either way; boundary (partial) row tiles are masked by Pallas.
            in_specs=[pl.BlockSpec((tr, cols), lambda i: (i, 0))],
            out_specs=pl.BlockSpec((tr, cols), lambda i: (i, 0)),
        ),
        compiler_params=pltpu.CompilerParams(
            dimension_semantics=("parallel",)),
    )(x2d)


# ---------------------------------------------------------------------------
# Forward pass: Squeeze(dims, n_squeezes)(x)
# ---------------------------------------------------------------------------
def squeeze_forward(x, dims, n_squeezes):
    """JAX/Pallas equivalent of Squeeze(dims, n_squeezes).forward(x)."""
    out_shape = squeeze_output_shape(x.shape, dims, n_squeezes)

    total = math.prod(x.shape)
    if total == 0:
        # Empty tensor: pure metadata change, nothing to copy.
        return jnp.reshape(x, out_shape)

    fallback_last = x.shape[-1] if x.ndim >= 1 else 1
    rows, cols = _pick_slab_shape(total, fallback_last)

    # Glue: present the data as a lane-dense 2D slab (element order unchanged).
    x2d = jnp.reshape(x, (rows, cols))
    y2d = pallas_identity_copy_2d(x2d)

    # Glue: reshape to the squeezed shape (element order is unchanged).
    return jnp.reshape(y2d, out_shape)


if __name__ == "__main__":
    key = jax.random.PRNGKey(0)

    # --- Case 1: module config squeeze dim 1 twice -------------------------
    dims = (1,)
    n_squeezes = (2,)
    # NCHW-style input with two size-1 axes at dim 1: (2, 1, 1, 16, 16)
    x = jax.random.normal(key, (2, 1, 1, 16, 16), dtype=jnp.float32)

    y = squeeze_forward(x, dims, n_squeezes)
    y = jax.block_until_ready(y)

    expected_shape = (2, 16, 16)
    assert y.shape == expected_shape, (y.shape, expected_shape)
    ref = jnp.reshape(x, expected_shape)
    assert jnp.array_equal(y, ref)

    # --- Case 2: multi-entry dims / non-1 dim no-op semantics --------------
    dims2 = (0, 1)
    n_squeezes2 = (1, 1)
    x2 = jax.random.normal(key, (1, 4, 1, 8, 32), dtype=jnp.float32)
    y2 = jax.block_until_ready(squeeze_forward(x2, dims2, n_squeezes2))
    # squeeze dim 0 once -> (4,1,8,32); squeeze dim 1 once -> (4,8,32)
    assert y2.shape == (4, 8, 32), y2.shape
    assert jnp.array_equal(y2, jnp.reshape(x2, (4, 8, 32)))

    print("KERNEL_OK")
</pallas_src>

<mosaic_0001>
module attributes {stable_mosaic.version = 11 : i64} {
  func.func @_copy_kernel(%arg0: i32, %arg1: memref<1x512xf32, #tpu.memory_space<vmem>>, %arg2: memref<1x512xf32, #tpu.memory_space<vmem>>) attributes {dimension_semantics = [#tpu.dimension_semantics<parallel>], iteration_bounds = array<i64: 1>, scalar_prefetch = 0 : i64, scratch_operands = 0 : i64, tpu.core_type = #tpu.core_type<tc>, window_params = [{transform_indices = @transform_0, window_bounds = array<i64: 1, 512>}, {transform_indices = @transform_1, window_bounds = array<i64: 1, 512>}]} {
    %c0 = arith.constant 0 : index
    %c0_0 = arith.constant 0 : index
    %0 = vector.load %arg1[%c0, %c0_0] : memref<1x512xf32, #tpu.memory_space<vmem>>, vector<1x512xf32>
    %c0_1 = arith.constant 0 : index
    %c0_2 = arith.constant 0 : index
    %1 = vector.load %arg2[%c0_1, %c0_2] : memref<1x512xf32, #tpu.memory_space<vmem>>, vector<1x512xf32>
    tpu.vector_store %arg2[%c0_1, %c0_2], %0 {strides = array<i32>} : memref<1x512xf32, #tpu.memory_space<vmem>>, vector<1x512xf32>,
    return
  }
  func.func @transform_0(%arg0: i32) -> (i32, i32) {
    %c0_i32 = arith.constant 0 : i32
    %c0_i32_0 = arith.constant 0 : i32
    return %arg0, %c0_i32 : i32, i32
  }
  func.func @transform_1(%arg0: i32) -> (i32, i32) {
    %c0_i32 = arith.constant 0 : i32
    %c0_i32_0 = arith.constant 0 : i32
    return %arg0, %c0_i32 : i32, i32
  }
}

</mosaic_0001>

<llo_original>
// kernel: tpu_custom_call.1
$region0: #{tpu_custom_call.1}
  #allocation0 [shape = 'u32[]', space=smem, size = 0x4, offset = 0x4, fixed_abs, tag = 'smem constant byte address 0x4 - core index']
  #allocation1 [shape = 'u32[144,128]{1,0:T(1,128)}', space=vmem, size = 0x12000, scoped, tag = 'internal scratch']
  %s0 = inlined_call_operand.hbm [shape: f32[1,512], index: 0, kind: input, shape index: {}]
  %s1 = inlined_call_operand.hbm [shape: f32[1,512], index: 1, kind: output, shape index: {}]
  %s2 = sld [smem:[#allocation0]]
  $region18: #{tpu_custom_call.1} parent=0
    _
  %s4 = ssub.s32 1, %s2
  %s5 = scalar_select 0, %s4, %s2
  $region1: #{tpu_custom_call.1} parent=0
    #allocation2 [shape = 'u8[2048]{0}', space=vmem, size = 0x800, scoped, tag = 'input window, operand 0, single buffered']
    #allocation3 [shape = 's32[1]{0}', space=sflag, size = 0x4, scoped, tag = 'scoped memory for tpu_custom_call.1']
    #allocation4 [shape = 's32[1]{0}', space=sflag, size = 0x4, scoped, tag = 'scoped memory for tpu_custom_call.1']
    #allocation5 [shape = 'u8[2048]{0}', space=vmem, size = 0x800, scoped, tag = 'output window, operand 0, single buffered']
    %6 = vsyncpa [#allocation3], 0
    %7 = vsyncpa [#allocation4], 0
    // Predicated region
    $region2: #{tpu_custom_call.1} parent=1 // pred_check
      _
    $region3: #{tpu_custom_call.1} parent=1 // pred_check_branch
      %9 = sbr.rel (0) target = $region5
    $region4: #{tpu_custom_call.1} parent=1 // pred_region
      %s11 = ssub.s32 64, 64
      %12 = vsyncadd [#allocation3], %s11
      %s14 = sshll.u32 [#allocation2], 4
      %s15 = int_to_ptr.vmem [resolvable:$true] %s14
      %17 = dma.hbm_to_vmem [thread:$0]  %s0, 64, %s15, [#allocation3]
    $region5: #{tpu_custom_call.1} parent=1 // pred_fallthru
      _
    // Predicated region
    $region6: #{tpu_custom_call.1} parent=1 // pred_check
      _
    $region7: #{tpu_custom_call.1} parent=1 // pred_check_branch
      %19 = sbr.rel (0) target = $region9
    $region8: #{tpu_custom_call.1} parent=1 // pred_region
      %20 = dma.done [#allocation3], 64
    $region9: #{tpu_custom_call.1} parent=1 // pred_fallthru
      _
    %v21 = vld [vmem:[#allocation2] sm:$0xf]
    %v22 = vlaneseq
    %vm23 = vcmp.ge.s32.totalorder %v22, 0
    %vm24 = vcmp.lt.s32.totalorder %v22, 512
    %vm25 = vmand %vm23, %vm24
    %26 = vst.msk [vmem:[#allocation5] sm:$0xf] %vm25, %v21
    // Predicated region
    $region10: #{tpu_custom_call.1} parent=1 // pred_check
      _
    $region11: #{tpu_custom_call.1} parent=1 // pred_check_branch
      %28 = sbr.rel (0) target = $region13
    $region12: #{tpu_custom_call.1} parent=1 // pred_region
      %s30 = ssub.s32 64, 64
      %31 = vsyncadd [#allocation4], %s30
      %s33 = sshll.u32 [#allocation5], 4
      %s34 = int_to_ptr.vmem [resolvable:$true] %s33
      %36 = dma.vmem_to_hbm [thread:$0]  %s34, 64, %s1, [#allocation4]
    $region13: #{tpu_custom_call.1} parent=1 // pred_fallthru
      _
    // Predicated region
    $region14: #{tpu_custom_call.1} parent=1 // pred_check
      _
    $region15: #{tpu_custom_call.1} parent=1 // pred_check_branch
      %38 = sbr.rel (0) target = $region17
    $region16: #{tpu_custom_call.1} parent=1 // pred_region
      %39 = dma.done [#allocation4], 64
    $region17: #{tpu_custom_call.1} parent=1 // pred_fallthru
      _
    %40 = vsyncpa [#allocation3], 1
    %41 = vsyncpa [#allocation4], 1

</llo_original>
